<compile_context>
chip_gen: v5e
topology: v5e:2x2
jax: 0.10.0
libtpu: 0.0.40
codegen_flags: <defaults>
</compile_context>

<pallas_src>
import functools

import jax
import jax.numpy as jnp
from jax.experimental import pallas as pl
from jax.experimental.pallas import tpu as pltpu


FEAT_IN = 3
H1 = 6
H2 = 6
OUT = 2

# Flat parameter vector layout (weights stored (in, out), row-major):
W1_OFF = 0
B1_OFF = W1_OFF + FEAT_IN * H1      # 18
W2_OFF = B1_OFF + H1                # 24
B2_OFF = W2_OFF + H1 * H2           # 60
W3_OFF = B2_OFF + H2                # 66
B3_OFF = W3_OFF + H2 * OUT          # 78
N_PARAMS = B3_OFF + OUT             # 80


def _mlp_kernel(x_ref, p_ref, o_ref):
    """One batch tile, batch mapped to the lane axis.

    x_ref: (FEAT_IN, tile_b)  VMEM  f32  (batch on lanes)
    p_ref: (N_PARAMS,)        SMEM  f32  (flat W1|b1|W2|b2|W3|b3, scalars)
    o_ref: (OUT, tile_b)      VMEM  f32
    """
    # Load the 3 input feature rows (each (1, tile_b), lane-dense).
    x_rows = [x_ref[k:k + 1, :] for k in range(FEAT_IN)]

    def dense(in_rows, in_dim, out_dim, w_off, b_off, relu):
        # out[j, :] = bias[j] + sum_k W[k, j] * in[k, :]   (scalar * vector FMAs)
        out_rows = []
        for j in range(out_dim):
            acc = in_rows[0] * p_ref[w_off + j]
            for k in range(1, in_dim):
                acc = acc + in_rows[k] * p_ref[w_off + k * out_dim + j]
            acc = acc + p_ref[b_off + j]
            if relu:
                acc = jnp.maximum(acc, 0.0)
            out_rows.append(acc)
        return out_rows

    h1 = dense(x_rows, FEAT_IN, H1, W1_OFF, B1_OFF, relu=True)
    h2 = dense(h1, H1, H2, W2_OFF, B2_OFF, relu=True)
    out = dense(h2, H2, OUT, W3_OFF, B3_OFF, relu=False)

    o_ref[...] = jnp.concatenate(out, axis=0).astype(o_ref.dtype)


def _pack_params(params):
    """Flatten W1/b1/W2/b2/W3/b3 into one (N_PARAMS,) f32 vector (for SMEM)."""
    vec = jnp.concatenate([
        params["w1"].reshape(-1), params["b1"].reshape(-1),
        params["w2"].reshape(-1), params["b2"].reshape(-1),
        params["w3"].reshape(-1), params["b3"].reshape(-1),
    ]).astype(jnp.float32)
    assert vec.shape == (N_PARAMS,)
    return vec


def _next_pow2(n):
    n = max(int(n), 1)
    return 1 << (n - 1).bit_length()


def _choose_tiling(B, max_tile_b):
    """Bucketed (tile_b, grid_b) so the jit key only depends on the bucket."""
    max_tile_b = 128 * _next_pow2(max(max_tile_b, 128) // 128)   # pow2 * 128
    B_pad = 128 * _next_pow2(pl.cdiv(max(B, 1), 128))            # pow2 * 128
    if B_pad <= 128:
        return 128, 1
    # Keep >= 2 grid steps (v7x has 2 TensorCores) while capping the tile.
    tile = min(max_tile_b, B_pad // 2)
    return tile, B_pad // tile


@functools.partial(jax.jit, static_argnames=("tile_b", "grid_b"))
def _net_forward_padded(xT, pvec, *, tile_b, grid_b):
    """xT: (FEAT_IN, B_pad) f32 with B_pad == tile_b * grid_b."""
    B_pad = tile_b * grid_b
    return pl.pallas_call(
        _mlp_kernel,
        out_shape=jax.ShapeDtypeStruct((OUT, B_pad), jnp.float32),
        grid=(grid_b,),
        in_specs=[
            pl.BlockSpec((FEAT_IN, tile_b), lambda i: (0, i)),
            # Tiny flat param vector lives in SMEM; scalar reads in-kernel.
            pl.BlockSpec(memory_space=pltpu.MemorySpace.SMEM),
        ],
        out_specs=pl.BlockSpec((OUT, tile_b), lambda i: (0, i)),
        compiler_params=pltpu.CompilerParams(
            dimension_semantics=("parallel",)),
    )(xT, pvec)


def net_forward(x, params, *, max_tile_b=32768):
    """Forward pass of `Net` (flatten -> fc1 -> relu -> fc2 -> relu -> fc3).

    x: (B, ...) with trailing dims flattening to 3 features.
    params: dict with w1 (3,6), b1 (6,), w2 (6,6), b2 (6,), w3 (6,2), b3 (2,)
            (weights stored as (in, out): computes x @ W + b).
    Returns (B, 2).
    """
    x2d = x.reshape(x.shape[0], -1).astype(jnp.float32)   # torch.flatten(x, 1)
    B = x2d.shape[0]
    assert x2d.shape[1] == FEAT_IN, f"expected {FEAT_IN} features, got {x2d.shape[1]}"

    tile_b, grid_b = _choose_tiling(B, max_tile_b)
    B_pad = tile_b * grid_b

    # Batch-on-lanes layout: (FEAT_IN, B_pad), zero-padded columns.
    xT = jnp.zeros((FEAT_IN, B_pad), jnp.float32).at[:, :B].set(x2d.T)
    pvec = _pack_params(params)

    outT = _net_forward_padded(xT, pvec, tile_b=tile_b, grid_b=grid_b)
    return outT[:, :B].T                                  # back to (B, 2)


def init_params(key):
    """Deterministic init matching PyTorch Linear's U(-1/sqrt(fan_in), ...)."""
    def linear(key, fan_in, fan_out):
        kw, kb = jax.random.split(key)
        bound = 1.0 / jnp.sqrt(float(fan_in))
        w = jax.random.uniform(kw, (fan_in, fan_out), jnp.float32, -bound, bound)
        b = jax.random.uniform(kb, (fan_out,), jnp.float32, -bound, bound)
        return w, b

    k1, k2, k3 = jax.random.split(key, 3)
    w1, b1 = linear(k1, FEAT_IN, H1)
    w2, b2 = linear(k2, H1, H2)
    w3, b3 = linear(k3, H2, OUT)
    return {"w1": w1, "b1": b1, "w2": w2, "b2": b2, "w3": w3, "b3": b3}


def _reference_forward(x, params):
    """Plain-JAX reference for correctness checks."""
    x2d = x.reshape(x.shape[0], -1).astype(jnp.float32)
    h1 = jnp.maximum(x2d @ params["w1"] + params["b1"], 0.0)
    h2 = jnp.maximum(h1 @ params["w2"] + params["b2"], 0.0)
    return h2 @ params["w3"] + params["b3"]


if __name__ == "__main__":
    key = jax.random.PRNGKey(0)
    kp, kx, kx2, kx3 = jax.random.split(key, 4)

    params = init_params(kp)

    # Small input consistent with the module: batch=4, 3 features
    # (e.g. a PID (error, integral, derivative) state vector).
    x = jax.random.normal(kx, (4, FEAT_IN), jnp.float32)
    y = jax.block_until_ready(net_forward(x, params))
    y_ref = _reference_forward(x, params)
    assert y.shape == (4, OUT)
    assert jnp.allclose(y, y_ref, atol=1e-5, rtol=1e-5)

    # Non-multiple-of-128 batch -> padded columns sliced off.
    x_mid = jax.random.normal(kx2, (37, FEAT_IN), jnp.float32)
    y_mid = jax.block_until_ready(net_forward(x_mid, params))
    y_mid_ref = _reference_forward(x_mid, params)
    assert y_mid.shape == (37, OUT)
    assert jnp.allclose(y_mid, y_mid_ref, atol=1e-5, rtol=1e-5)

    # Exercise the multi-step grid path (small max_tile_b forces grid > 1).
    x_big = jax.random.normal(kx3, (300, FEAT_IN), jnp.float32)
    y_big = jax.block_until_ready(net_forward(x_big, params, max_tile_b=128))
    y_big_ref = _reference_forward(x_big, params)
    assert y_big.shape == (300, OUT)
    assert jnp.allclose(y_big, y_big_ref, atol=1e-5, rtol=1e-5)

    print("KERNEL_OK")
</pallas_src>

<mosaic_0001>
module attributes {stable_mosaic.version = 11 : i64} {
  func.func @_mlp_kernel(%arg0: i32, %arg1: memref<3x128xf32, #tpu.memory_space<vmem>>, %arg2: memref<80xf32, #tpu.memory_space<smem>>, %arg3: memref<2x128xf32, #tpu.memory_space<vmem>>) attributes {dimension_semantics = [#tpu.dimension_semantics<parallel>], iteration_bounds = array<i64: 1>, scalar_prefetch = 0 : i64, scratch_operands = 0 : i64, tpu.core_type = #tpu.core_type<tc>, window_params = [{transform_indices = @transform_0, window_bounds = array<i64: 3, 128>}, {transform_indices = @transform_1, window_bounds = array<i64: 80>}, {transform_indices = @transform_2, window_bounds = array<i64: 2, 128>}]} {
    %c0 = arith.constant 0 : index
    %c0_0 = arith.constant 0 : index
    %0 = vector.load %arg1[%c0, %c0_0] : memref<3x128xf32, #tpu.memory_space<vmem>>, vector<1x128xf32>
    %c1 = arith.constant 1 : index
    %c0_1 = arith.constant 0 : index
    %1 = vector.load %arg1[%c1, %c0_1] : memref<3x128xf32, #tpu.memory_space<vmem>>, vector<1x128xf32>
    %c2 = arith.constant 2 : index
    %c0_2 = arith.constant 0 : index
    %2 = vector.load %arg1[%c2, %c0_2] : memref<3x128xf32, #tpu.memory_space<vmem>>, vector<1x128xf32>
    %c0_3 = arith.constant 0 : index
    %3 = memref.load %arg2[%c0_3] : memref<80xf32, #tpu.memory_space<smem>>
    %4 = vector.broadcast %3 : f32 to vector<1x128xf32>
    %5 = arith.mulf %0, %4 : vector<1x128xf32>
    %c6 = arith.constant 6 : index
    %6 = memref.load %arg2[%c6] : memref<80xf32, #tpu.memory_space<smem>>
    %7 = vector.broadcast %6 : f32 to vector<1x128xf32>
    %8 = arith.mulf %1, %7 : vector<1x128xf32>
    %9 = arith.addf %5, %8 : vector<1x128xf32>
    %c12 = arith.constant 12 : index
    %10 = memref.load %arg2[%c12] : memref<80xf32, #tpu.memory_space<smem>>
    %11 = vector.broadcast %10 : f32 to vector<1x128xf32>
    %12 = arith.mulf %2, %11 : vector<1x128xf32>
    %13 = arith.addf %9, %12 : vector<1x128xf32>
    %c18 = arith.constant 18 : index
    %14 = memref.load %arg2[%c18] : memref<80xf32, #tpu.memory_space<smem>>
    %15 = vector.broadcast %14 : f32 to vector<1x128xf32>
    %16 = arith.addf %13, %15 : vector<1x128xf32>
    %cst = arith.constant 0.000000e+00 : f32
    %17 = vector.broadcast %cst : f32 to vector<1x128xf32>
    %18 = arith.maximumf %16, %17 : vector<1x128xf32>
    %c1_4 = arith.constant 1 : index
    %19 = memref.load %arg2[%c1_4] : memref<80xf32, #tpu.memory_space<smem>>
    %20 = vector.broadcast %19 : f32 to vector<1x128xf32>
    %21 = arith.mulf %0, %20 : vector<1x128xf32>
    %c7 = arith.constant 7 : index
    %22 = memref.load %arg2[%c7] : memref<80xf32, #tpu.memory_space<smem>>
    %23 = vector.broadcast %22 : f32 to vector<1x128xf32>
    %24 = arith.mulf %1, %23 : vector<1x128xf32>
    %25 = arith.addf %21, %24 : vector<1x128xf32>
    %c13 = arith.constant 13 : index
    %26 = memref.load %arg2[%c13] : memref<80xf32, #tpu.memory_space<smem>>
    %27 = vector.broadcast %26 : f32 to vector<1x128xf32>
    %28 = arith.mulf %2, %27 : vector<1x128xf32>
    %29 = arith.addf %25, %28 : vector<1x128xf32>
    %c19 = arith.constant 19 : index
    %30 = memref.load %arg2[%c19] : memref<80xf32, #tpu.memory_space<smem>>
    %31 = vector.broadcast %30 : f32 to vector<1x128xf32>
    %32 = arith.addf %29, %31 : vector<1x128xf32>
    %cst_5 = arith.constant 0.000000e+00 : f32
    %33 = vector.broadcast %cst_5 : f32 to vector<1x128xf32>
    %34 = arith.maximumf %32, %33 : vector<1x128xf32>
    %c2_6 = arith.constant 2 : index
    %35 = memref.load %arg2[%c2_6] : memref<80xf32, #tpu.memory_space<smem>>
    %36 = vector.broadcast %35 : f32 to vector<1x128xf32>
    %37 = arith.mulf %0, %36 : vector<1x128xf32>
    %c8 = arith.constant 8 : index
    %38 = memref.load %arg2[%c8] : memref<80xf32, #tpu.memory_space<smem>>
    %39 = vector.broadcast %38 : f32 to vector<1x128xf32>
    %40 = arith.mulf %1, %39 : vector<1x128xf32>
    %41 = arith.addf %37, %40 : vector<1x128xf32>
    %c14 = arith.constant 14 : index
    %42 = memref.load %arg2[%c14] : memref<80xf32, #tpu.memory_space<smem>>
    %43 = vector.broadcast %42 : f32 to vector<1x128xf32>
    %44 = arith.mulf %2, %43 : vector<1x128xf32>
    %45 = arith.addf %41, %44 : vector<1x128xf32>
    %c20 = arith.constant 20 : index
    %46 = memref.load %arg2[%c20] : memref<80xf32, #tpu.memory_space<smem>>
    %47 = vector.broadcast %46 : f32 to vector<1x128xf32>
    %48 = arith.addf %45, %47 : vector<1x128xf32>
    %cst_7 = arith.constant 0.000000e+00 : f32
    %49 = vector.broadcast %cst_7 : f32 to vector<1x128xf32>
    %50 = arith.maximumf %48, %49 : vector<1x128xf32>
    %c3 = arith.constant 3 : index
    %51 = memref.load %arg2[%c3] : memref<80xf32, #tpu.memory_space<smem>>
    %52 = vector.broadcast %51 : f32 to vector<1x128xf32>
    %53 = arith.mulf %0, %52 : vector<1x128xf32>
    %c9 = arith.constant 9 : index
    %54 = memref.load %arg2[%c9] : memref<80xf32, #tpu.memory_space<smem>>
    %55 = vector.broadcast %54 : f32 to vector<1x128xf32>
    %56 = arith.mulf %1, %55 : vector<1x128xf32>
    %57 = arith.addf %53, %56 : vector<1x128xf32>
    %c15 = arith.constant 15 : index
    %58 = memref.load %arg2[%c15] : memref<80xf32, #tpu.memory_space<smem>>
    %59 = vector.broadcast %58 : f32 to vector<1x128xf32>
    %60 = arith.mulf %2, %59 : vector<1x128xf32>
    %61 = arith.addf %57, %60 : vector<1x128xf32>
    %c21 = arith.constant 21 : index
    %62 = memref.load %arg2[%c21] : memref<80xf32, #tpu.memory_space<smem>>
    %63 = vector.broadcast %62 : f32 to vector<1x128xf32>
    %64 = arith.addf %61, %63 : vector<1x128xf32>
    %cst_8 = arith.constant 0.000000e+00 : f32
    %65 = vector.broadcast %cst_8 : f32 to vector<1x128xf32>
    %66 = arith.maximumf %64, %65 : vector<1x128xf32>
    %c4 = arith.constant 4 : index
    %67 = memref.load %arg2[%c4] : memref<80xf32, #tpu.memory_space<smem>>
    %68 = vector.broadcast %67 : f32 to vector<1x128xf32>
    %69 = arith.mulf %0, %68 : vector<1x128xf32>
    %c10 = arith.constant 10 : index
    %70 = memref.load %arg2[%c10] : memref<80xf32, #tpu.memory_space<smem>>
    %71 = vector.broadcast %70 : f32 to vector<1x128xf32>
    %72 = arith.mulf %1, %71 : vector<1x128xf32>
    %73 = arith.addf %69, %72 : vector<1x128xf32>
    %c16 = arith.constant 16 : index
    %74 = memref.load %arg2[%c16] : memref<80xf32, #tpu.memory_space<smem>>
    %75 = vector.broadcast %74 : f32 to vector<1x128xf32>
    %76 = arith.mulf %2, %75 : vector<1x128xf32>
    %77 = arith.addf %73, %76 : vector<1x128xf32>
    %c22 = arith.constant 22 : index
    %78 = memref.load %arg2[%c22] : memref<80xf32, #tpu.memory_space<smem>>
    %79 = vector.broadcast %78 : f32 to vector<1x128xf32>
    %80 = arith.addf %77, %79 : vector<1x128xf32>
    %cst_9 = arith.constant 0.000000e+00 : f32
    %81 = vector.broadcast %cst_9 : f32 to vector<1x128xf32>
    %82 = arith.maximumf %80, %81 : vector<1x128xf32>
    %c5 = arith.constant 5 : index
    %83 = memref.load %arg2[%c5] : memref<80xf32, #tpu.memory_space<smem>>
    %84 = vector.broadcast %83 : f32 to vector<1x128xf32>
    %85 = arith.mulf %0, %84 : vector<1x128xf32>
    %c11 = arith.constant 11 : index
    %86 = memref.load %arg2[%c11] : memref<80xf32, #tpu.memory_space<smem>>
    %87 = vector.broadcast %86 : f32 to vector<1x128xf32>
    %88 = arith.mulf %1, %87 : vector<1x128xf32>
    %89 = arith.addf %85, %88 : vector<1x128xf32>
    %c17 = arith.constant 17 : index
    %90 = memref.load %arg2[%c17] : memref<80xf32, #tpu.memory_space<smem>>
    %91 = vector.broadcast %90 : f32 to vector<1x128xf32>
    %92 = arith.mulf %2, %91 : vector<1x128xf32>
    %93 = arith.addf %89, %92 : vector<1x128xf32>
    %c23 = arith.constant 23 : index
    %94 = memref.load %arg2[%c23] : memref<80xf32, #tpu.memory_space<smem>>
    %95 = vector.broadcast %94 : f32 to vector<1x128xf32>
    %96 = arith.addf %93, %95 : vector<1x128xf32>
    %cst_10 = arith.constant 0.000000e+00 : f32
    %97 = vector.broadcast %cst_10 : f32 to vector<1x128xf32>
    %98 = arith.maximumf %96, %97 : vector<1x128xf32>
    %c24 = arith.constant 24 : index
    %99 = memref.load %arg2[%c24] : memref<80xf32, #tpu.memory_space<smem>>
    %100 = vector.broadcast %99 : f32 to vector<1x128xf32>
    %101 = arith.mulf %18, %100 : vector<1x128xf32>
    %c30 = arith.constant 30 : index
    %102 = memref.load %arg2[%c30] : memref<80xf32, #tpu.memory_space<smem>>
    %103 = vector.broadcast %102 : f32 to vector<1x128xf32>
    %104 = arith.mulf %34, %103 : vector<1x128xf32>
    %105 = arith.addf %101, %104 : vector<1x128xf32>
    %c36 = arith.constant 36 : index
    %106 = memref.load %arg2[%c36] : memref<80xf32, #tpu.memory_space<smem>>
    %107 = vector.broadcast %106 : f32 to vector<1x128xf32>
    %108 = arith.mulf %50, %107 : vector<1x128xf32>
    %109 = arith.addf %105, %108 : vector<1x128xf32>
    %c42 = arith.constant 42 : index
    %110 = memref.load %arg2[%c42] : memref<80xf32, #tpu.memory_space<smem>>
    %111 = vector.broadcast %110 : f32 to vector<1x128xf32>
    %112 = arith.mulf %66, %111 : vector<1x128xf32>
    %113 = arith.addf %109, %112 : vector<1x128xf32>
    %c48 = arith.constant 48 : index
    %114 = memref.load %arg2[%c48] : memref<80xf32, #tpu.memory_space<smem>>
    %115 = vector.broadcast %114 : f32 to vector<1x128xf32>
    %116 = arith.mulf %82, %115 : vector<1x128xf32>
    %117 = arith.addf %113, %116 : vector<1x128xf32>
    %c54 = arith.constant 54 : index
    %118 = memref.load %arg2[%c54] : memref<80xf32, #tpu.memory_space<smem>>
    %119 = vector.broadcast %118 : f32 to vector<1x128xf32>
    %120 = arith.mulf %98, %119 : vector<1x128xf32>
    %121 = arith.addf %117, %120 : vector<1x128xf32>
    %c60 = arith.constant 60 : index
    %122 = memref.load %arg2[%c60] : memref<80xf32, #tpu.memory_space<smem>>
    %123 = vector.broadcast %122 : f32 to vector<1x128xf32>
    %124 = arith.addf %121, %123 : vector<1x128xf32>
    %cst_11 = arith.constant 0.000000e+00 : f32
    %125 = vector.broadcast %cst_11 : f32 to vector<1x128xf32>
    %126 = arith.maximumf %124, %125 : vector<1x128xf32>
    %c25 = arith.constant 25 : index
    %127 = memref.load %arg2[%c25] : memref<80xf32, #tpu.memory_space<smem>>
    %128 = vector.broadcast %127 : f32 to vector<1x128xf32>
    %129 = arith.mulf %18, %128 : vector<1x128xf32>
    %c31 = arith.constant 31 : index
    %130 = memref.load %arg2[%c31] : memref<80xf32, #tpu.memory_space<smem>>
    %131 = vector.broadcast %130 : f32 to vector<1x128xf32>
    %132 = arith.mulf %34, %131 : vector<1x128xf32>
    %133 = arith.addf %129, %132 : vector<1x128xf32>
    %c37 = arith.constant 37 : index
    %134 = memref.load %arg2[%c37] : memref<80xf32, #tpu.memory_space<smem>>
    %135 = vector.broadcast %134 : f32 to vector<1x128xf32>
    %136 = arith.mulf %50, %135 : vector<1x128xf32>
    %137 = arith.addf %133, %136 : vector<1x128xf32>
    %c43 = arith.constant 43 : index
    %138 = memref.load %arg2[%c43] : memref<80xf32, #tpu.memory_space<smem>>
    %139 = vector.broadcast %138 : f32 to vector<1x128xf32>
    %140 = arith.mulf %66, %139 : vector<1x128xf32>
    %141 = arith.addf %137, %140 : vector<1x128xf32>
    %c49 = arith.constant 49 : index
    %142 = memref.load %arg2[%c49] : memref<80xf32, #tpu.memory_space<smem>>
    %143 = vector.broadcast %142 : f32 to vector<1x128xf32>
    %144 = arith.mulf %82, %143 : vector<1x128xf32>
    %145 = arith.addf %141, %144 : vector<1x128xf32>
    %c55 = arith.constant 55 : index
    %146 = memref.load %arg2[%c55] : memref<80xf32, #tpu.memory_space<smem>>
    %147 = vector.broadcast %146 : f32 to vector<1x128xf32>
    %148 = arith.mulf %98, %147 : vector<1x128xf32>
    %149 = arith.addf %145, %148 : vector<1x128xf32>
    %c61 = arith.constant 61 : index
    %150 = memref.load %arg2[%c61] : memref<80xf32, #tpu.memory_space<smem>>
    %151 = vector.broadcast %150 : f32 to vector<1x128xf32>
    %152 = arith.addf %149, %151 : vector<1x128xf32>
    %cst_12 = arith.constant 0.000000e+00 : f32
    %153 = vector.broadcast %cst_12 : f32 to vector<1x128xf32>
    %154 = arith.maximumf %152, %153 : vector<1x128xf32>
    %c26 = arith.constant 26 : index
    %155 = memref.load %arg2[%c26] : memref<80xf32, #tpu.memory_space<smem>>
    %156 = vector.broadcast %155 : f32 to vector<1x128xf32>
    %157 = arith.mulf %18, %156 : vector<1x128xf32>
    %c32 = arith.constant 32 : index
    %158 = memref.load %arg2[%c32] : memref<80xf32, #tpu.memory_space<smem>>
    %159 = vector.broadcast %158 : f32 to vector<1x128xf32>
    %160 = arith.mulf %34, %159 : vector<1x128xf32>
    %161 = arith.addf %157, %160 : vector<1x128xf32>
    %c38 = arith.constant 38 : index
    %162 = memref.load %arg2[%c38] : memref<80xf32, #tpu.memory_space<smem>>
    %163 = vector.broadcast %162 : f32 to vector<1x128xf32>
    %164 = arith.mulf %50, %163 : vector<1x128xf32>
    %165 = arith.addf %161, %164 : vector<1x128xf32>
    %c44 = arith.constant 44 : index
    %166 = memref.load %arg2[%c44] : memref<80xf32, #tpu.memory_space<smem>>
    %167 = vector.broadcast %166 : f32 to vector<1x128xf32>
    %168 = arith.mulf %66, %167 : vector<1x128xf32>
    %169 = arith.addf %165, %168 : vector<1x128xf32>
    %c50 = arith.constant 50 : index
    %170 = memref.load %arg2[%c50] : memref<80xf32, #tpu.memory_space<smem>>
    %171 = vector.broadcast %170 : f32 to vector<1x128xf32>
    %172 = arith.mulf %82, %171 : vector<1x128xf32>
    %173 = arith.addf %169, %172 : vector<1x128xf32>
    %c56 = arith.constant 56 : index
    %174 = memref.load %arg2[%c56] : memref<80xf32, #tpu.memory_space<smem>>
    %175 = vector.broadcast %174 : f32 to vector<1x128xf32>
    %176 = arith.mulf %98, %175 : vector<1x128xf32>
    %177 = arith.addf %173, %176 : vector<1x128xf32>
    %c62 = arith.constant 62 : index
    %178 = memref.load %arg2[%c62] : memref<80xf32, #tpu.memory_space<smem>>
    %179 = vector.broadcast %178 : f32 to vector<1x128xf32>
    %180 = arith.addf %177, %179 : vector<1x128xf32>
    %cst_13 = arith.constant 0.000000e+00 : f32
    %181 = vector.broadcast %cst_13 : f32 to vector<1x128xf32>
    %182 = arith.maximumf %180, %181 : vector<1x128xf32>
    %c27 = arith.constant 27 : index
    %183 = memref.load %arg2[%c27] : memref<80xf32, #tpu.memory_space<smem>>
    %184 = vector.broadcast %183 : f32 to vector<1x128xf32>
    %185 = arith.mulf %18, %184 : vector<1x128xf32>
    %c33 = arith.constant 33 : index
    %186 = memref.load %arg2[%c33] : memref<80xf32, #tpu.memory_space<smem>>
    %187 = vector.broadcast %186 : f32 to vector<1x128xf32>
    %188 = arith.mulf %34, %187 : vector<1x128xf32>
    %189 = arith.addf %185, %188 : vector<1x128xf32>
    %c39 = arith.constant 39 : index
    %190 = memref.load %arg2[%c39] : memref<80xf32, #tpu.memory_space<smem>>
    %191 = vector.broadcast %190 : f32 to vector<1x128xf32>
    %192 = arith.mulf %50, %191 : vector<1x128xf32>
    %193 = arith.addf %189, %192 : vector<1x128xf32>
    %c45 = arith.constant 45 : index
    %194 = memref.load %arg2[%c45] : memref<80xf32, #tpu.memory_space<smem>>
    %195 = vector.broadcast %194 : f32 to vector<1x128xf32>
    %196 = arith.mulf %66, %195 : vector<1x128xf32>
    %197 = arith.addf %193, %196 : vector<1x128xf32>
    %c51 = arith.constant 51 : index
    %198 = memref.load %arg2[%c51] : memref<80xf32, #tpu.memory_space<smem>>
    %199 = vector.broadcast %198 : f32 to vector<1x128xf32>
    %200 = arith.mulf %82, %199 : vector<1x128xf32>
    %201 = arith.addf %197, %200 : vector<1x128xf32>
    %c57 = arith.constant 57 : index
    %202 = memref.load %arg2[%c57] : memref<80xf32, #tpu.memory_space<smem>>
    %203 = vector.broadcast %202 : f32 to vector<1x128xf32>
    %204 = arith.mulf %98, %203 : vector<1x128xf32>
    %205 = arith.addf %201, %204 : vector<1x128xf32>
    %c63 = arith.constant 63 : index
    %206 = memref.load %arg2[%c63] : memref<80xf32, #tpu.memory_space<smem>>
    %207 = vector.broadcast %206 : f32 to vector<1x128xf32>
    %208 = arith.addf %205, %207 : vector<1x128xf32>
    %cst_14 = arith.constant 0.000000e+00 : f32
    %209 = vector.broadcast %cst_14 : f32 to vector<1x128xf32>
    %210 = arith.maximumf %208, %209 : vector<1x128xf32>
    %c28 = arith.constant 28 : index
    %211 = memref.load %arg2[%c28] : memref<80xf32, #tpu.memory_space<smem>>
    %212 = vector.broadcast %211 : f32 to vector<1x128xf32>
    %213 = arith.mulf %18, %212 : vector<1x128xf32>
    %c34 = arith.constant 34 : index
    %214 = memref.load %arg2[%c34] : memref<80xf32, #tpu.memory_space<smem>>
    %215 = vector.broadcast %214 : f32 to vector<1x128xf32>
    %216 = arith.mulf %34, %215 : vector<1x128xf32>
    %217 = arith.addf %213, %216 : vector<1x128xf32>
    %c40 = arith.constant 40 : index
    %218 = memref.load %arg2[%c40] : memref<80xf32, #tpu.memory_space<smem>>
    %219 = vector.broadcast %218 : f32 to vector<1x128xf32>
    %220 = arith.mulf %50, %219 : vector<1x128xf32>
    %221 = arith.addf %217, %220 : vector<1x128xf32>
    %c46 = arith.constant 46 : index
    %222 = memref.load %arg2[%c46] : memref<80xf32, #tpu.memory_space<smem>>
    %223 = vector.broadcast %222 : f32 to vector<1x128xf32>
    %224 = arith.mulf %66, %223 : vector<1x128xf32>
    %225 = arith.addf %221, %224 : vector<1x128xf32>
    %c52 = arith.constant 52 : index
    %226 = memref.load %arg2[%c52] : memref<80xf32, #tpu.memory_space<smem>>
    %227 = vector.broadcast %226 : f32 to vector<1x128xf32>
    %228 = arith.mulf %82, %227 : vector<1x128xf32>
    %229 = arith.addf %225, %228 : vector<1x128xf32>
    %c58 = arith.constant 58 : index
    %230 = memref.load %arg2[%c58] : memref<80xf32, #tpu.memory_space<smem>>
    %231 = vector.broadcast %230 : f32 to vector<1x128xf32>
    %232 = arith.mulf %98, %231 : vector<1x128xf32>
    %233 = arith.addf %229, %232 : vector<1x128xf32>
    %c64 = arith.constant 64 : index
    %234 = memref.load %arg2[%c64] : memref<80xf32, #tpu.memory_space<smem>>
    %235 = vector.broadcast %234 : f32 to vector<1x128xf32>
    %236 = arith.addf %233, %235 : vector<1x128xf32>
    %cst_15 = arith.constant 0.000000e+00 : f32
    %237 = vector.broadcast %cst_15 : f32 to vector<1x128xf32>
    %238 = arith.maximumf %236, %237 : vector<1x128xf32>
    %c29 = arith.constant 29 : index
    %239 = memref.load %arg2[%c29] : memref<80xf32, #tpu.memory_space<smem>>
    %240 = vector.broadcast %239 : f32 to vector<1x128xf32>
    %241 = arith.mulf %18, %240 : vector<1x128xf32>
    %c35 = arith.constant 35 : index
    %242 = memref.load %arg2[%c35] : memref<80xf32, #tpu.memory_space<smem>>
    %243 = vector.broadcast %242 : f32 to vector<1x128xf32>
    %244 = arith.mulf %34, %243 : vector<1x128xf32>
    %245 = arith.addf %241, %244 : vector<1x128xf32>
    %c41 = arith.constant 41 : index
    %246 = memref.load %arg2[%c41] : memref<80xf32, #tpu.memory_space<smem>>
    %247 = vector.broadcast %246 : f32 to vector<1x128xf32>
    %248 = arith.mulf %50, %247 : vector<1x128xf32>
    %249 = arith.addf %245, %248 : vector<1x128xf32>
    %c47 = arith.constant 47 : index
    %250 = memref.load %arg2[%c47] : memref<80xf32, #tpu.memory_space<smem>>
    %251 = vector.broadcast %250 : f32 to vector<1x128xf32>
    %252 = arith.mulf %66, %251 : vector<1x128xf32>
    %253 = arith.addf %249, %252 : vector<1x128xf32>
    %c53 = arith.constant 53 : index
    %254 = memref.load %arg2[%c53] : memref<80xf32, #tpu.memory_space<smem>>
    %255 = vector.broadcast %254 : f32 to vector<1x128xf32>
    %256 = arith.mulf %82, %255 : vector<1x128xf32>
    %257 = arith.addf %253, %256 : vector<1x128xf32>
    %c59 = arith.constant 59 : index
    %258 = memref.load %arg2[%c59] : memref<80xf32, #tpu.memory_space<smem>>
    %259 = vector.broadcast %258 : f32 to vector<1x128xf32>
    %260 = arith.mulf %98, %259 : vector<1x128xf32>
    %261 = arith.addf %257, %260 : vector<1x128xf32>
    %c65 = arith.constant 65 : index
    %262 = memref.load %arg2[%c65] : memref<80xf32, #tpu.memory_space<smem>>
    %263 = vector.broadcast %262 : f32 to vector<1x128xf32>
    %264 = arith.addf %261, %263 : vector<1x128xf32>
    %cst_16 = arith.constant 0.000000e+00 : f32
    %265 = vector.broadcast %cst_16 : f32 to vector<1x128xf32>
    %266 = arith.maximumf %264, %265 : vector<1x128xf32>
    %c66 = arith.constant 66 : index
    %267 = memref.load %arg2[%c66] : memref<80xf32, #tpu.memory_space<smem>>
    %268 = vector.broadcast %267 : f32 to vector<1x128xf32>
    %269 = arith.mulf %126, %268 : vector<1x128xf32>
    %c68 = arith.constant 68 : index
    %270 = memref.load %arg2[%c68] : memref<80xf32, #tpu.memory_space<smem>>
    %271 = vector.broadcast %270 : f32 to vector<1x128xf32>
    %272 = arith.mulf %154, %271 : vector<1x128xf32>
    %273 = arith.addf %269, %272 : vector<1x128xf32>
    %c70 = arith.constant 70 : index
    %274 = memref.load %arg2[%c70] : memref<80xf32, #tpu.memory_space<smem>>
    %275 = vector.broadcast %274 : f32 to vector<1x128xf32>
    %276 = arith.mulf %182, %275 : vector<1x128xf32>
    %277 = arith.addf %273, %276 : vector<1x128xf32>
    %c72 = arith.constant 72 : index
    %278 = memref.load %arg2[%c72] : memref<80xf32, #tpu.memory_space<smem>>
    %279 = vector.broadcast %278 : f32 to vector<1x128xf32>
    %280 = arith.mulf %210, %279 : vector<1x128xf32>
    %281 = arith.addf %277, %280 : vector<1x128xf32>
    %c74 = arith.constant 74 : index
    %282 = memref.load %arg2[%c74] : memref<80xf32, #tpu.memory_space<smem>>
    %283 = vector.broadcast %282 : f32 to vector<1x128xf32>
    %284 = arith.mulf %238, %283 : vector<1x128xf32>
    %285 = arith.addf %281, %284 : vector<1x128xf32>
    %c76 = arith.constant 76 : index
    %286 = memref.load %arg2[%c76] : memref<80xf32, #tpu.memory_space<smem>>
    %287 = vector.broadcast %286 : f32 to vector<1x128xf32>
    %288 = arith.mulf %266, %287 : vector<1x128xf32>
    %289 = arith.addf %285, %288 : vector<1x128xf32>
    %c78 = arith.constant 78 : index
    %290 = memref.load %arg2[%c78] : memref<80xf32, #tpu.memory_space<smem>>
    %291 = vector.broadcast %290 : f32 to vector<1x128xf32>
    %292 = arith.addf %289, %291 : vector<1x128xf32>
    %c67 = arith.constant 67 : index
    %293 = memref.load %arg2[%c67] : memref<80xf32, #tpu.memory_space<smem>>
    %294 = vector.broadcast %293 : f32 to vector<1x128xf32>
    %295 = arith.mulf %126, %294 : vector<1x128xf32>
    %c69 = arith.constant 69 : index
    %296 = memref.load %arg2[%c69] : memref<80xf32, #tpu.memory_space<smem>>
    %297 = vector.broadcast %296 : f32 to vector<1x128xf32>
    %298 = arith.mulf %154, %297 : vector<1x128xf32>
    %299 = arith.addf %295, %298 : vector<1x128xf32>
    %c71 = arith.constant 71 : index
    %300 = memref.load %arg2[%c71] : memref<80xf32, #tpu.memory_space<smem>>
    %301 = vector.broadcast %300 : f32 to vector<1x128xf32>
    %302 = arith.mulf %182, %301 : vector<1x128xf32>
    %303 = arith.addf %299, %302 : vector<1x128xf32>
    %c73 = arith.constant 73 : index
    %304 = memref.load %arg2[%c73] : memref<80xf32, #tpu.memory_space<smem>>
    %305 = vector.broadcast %304 : f32 to vector<1x128xf32>
    %306 = arith.mulf %210, %305 : vector<1x128xf32>
    %307 = arith.addf %303, %306 : vector<1x128xf32>
    %c75 = arith.constant 75 : index
    %308 = memref.load %arg2[%c75] : memref<80xf32, #tpu.memory_space<smem>>
    %309 = vector.broadcast %308 : f32 to vector<1x128xf32>
    %310 = arith.mulf %238, %309 : vector<1x128xf32>
    %311 = arith.addf %307, %310 : vector<1x128xf32>
    %c77 = arith.constant 77 : index
    %312 = memref.load %arg2[%c77] : memref<80xf32, #tpu.memory_space<smem>>
    %313 = vector.broadcast %312 : f32 to vector<1x128xf32>
    %314 = arith.mulf %266, %313 : vector<1x128xf32>
    %315 = arith.addf %311, %314 : vector<1x128xf32>
    %c79 = arith.constant 79 : index
    %316 = memref.load %arg2[%c79] : memref<80xf32, #tpu.memory_space<smem>>
    %317 = vector.broadcast %316 : f32 to vector<1x128xf32>
    %318 = arith.addf %315, %317 : vector<1x128xf32>
    %319 = tpu.concatenate %292, %318 in 0 : vector<1x128xf32>, vector<1x128xf32> -> vector<2x128xf32>
    %c0_17 = arith.constant 0 : index
    %c0_18 = arith.constant 0 : index
    %320 = vector.load %arg3[%c0_17, %c0_18] : memref<2x128xf32, #tpu.memory_space<vmem>>, vector<2x128xf32>
    tpu.vector_store %arg3[%c0_17, %c0_18], %319 {strides = array<i32>} : memref<2x128xf32, #tpu.memory_space<vmem>>, vector<2x128xf32>,
    return
  }
  func.func @transform_0(%arg0: i32) -> (i32, i32) {
    %c0_i32 = arith.constant 0 : i32
    %c0_i32_0 = arith.constant 0 : i32
    return %c0_i32, %arg0 : i32, i32
  }
  func.func @transform_1(%arg0: i32) -> i32 {
    %c0_i32 = arith.constant 0 : i32
    %c0_i32_0 = arith.constant 0 : i32
    return %c0_i32 : i32
  }
  func.func @transform_2(%arg0: i32) -> (i32, i32) {
    %c0_i32 = arith.constant 0 : i32
    %c0_i32_0 = arith.constant 0 : i32
    return %c0_i32, %arg0 : i32, i32
  }
}

</mosaic_0001>

<llo_original>
// kernel: _net_forward_padded.1
$region0: #{_net_forward_padded.1}
  #allocation0 [shape = 'u32[]', space=smem, size = 0x4, offset = 0x4, fixed_abs, tag = 'smem constant byte address 0x4 - core index']
  #allocation1 [shape = 'u32[72,128]{1,0:T(1,128)}', space=vmem, size = 0x9000, scoped, tag = 'internal scratch']
  %s0 = inlined_call_operand.hbm [shape: f32[3,128], index: 0, kind: input, shape index: {}]
  %s1 = inlined_call_operand.hbm [shape: f32[80], index: 1, kind: input, shape index: {}]
  %s2 = inlined_call_operand.hbm [shape: f32[2,128], index: 2, kind: output, shape index: {}]
  %s3 = sld [smem:[#allocation0]]
  $region26: #{_net_forward_padded.1} parent=0
    _
  %s5 = ssub.s32 1, %s3
  %s6 = scalar_select 0, %s5, %s3
  $region1: #{_net_forward_padded.1} parent=0
    #allocation2 [shape = 'u8[2048]{0}', space=vmem, size = 0x800, scoped, tag = 'input window, operand 0, single buffered']
    #allocation3 [shape = 's32[1]{0}', space=sflag, size = 0x4, scoped, tag = 'scoped memory for _net_forward_padded.1']
    #allocation4 [shape = 's32[1]{0}', space=sflag, size = 0x4, scoped, tag = 'scoped memory for _net_forward_padded.1']
    #allocation5 [shape = 's32[1]{0}', space=sflag, size = 0x4, scoped, tag = 'scoped memory for _net_forward_padded.1']
    #allocation6 [shape = 'u8[512]{0}', space=smem, size = 0x200, scoped, tag = 'input window, operand 1, single buffered']
    #allocation7 [shape = 'u8[1024]{0}', space=vmem, size = 0x400, scoped, tag = 'output window, operand 0, single buffered']
    %7 = vsyncpa [#allocation3], 0
    %8 = vsyncpa [#allocation5], 0
    %9 = vsyncpa [#allocation4], 0
    // Predicated region
    $region2: #{_net_forward_padded.1} parent=1 // pred_check
      _
    $region3: #{_net_forward_padded.1} parent=1 // pred_check_branch
      %11 = sbr.rel (0) target = $region5
    $region4: #{_net_forward_padded.1} parent=1 // pred_region
      %13 = vsyncadd [#allocation3], 0
      %s15 = sshll.u32 %s0, 4
      %s16 = int_to_ptr.hbm [resolvable:$true] %s15
      %s17 = sshll.u32 [#allocation2], 4
      %s18 = int_to_ptr.vmem [resolvable:$true] %s17
      %20 = dma.hbm_to_vmem [thread:$0]  %s16, 64, %s18, [#allocation3]
    $region5: #{_net_forward_padded.1} parent=1 // pred_fallthru
      _
    // Predicated region
    $region6: #{_net_forward_padded.1} parent=1 // pred_check
      _
    $region7: #{_net_forward_padded.1} parent=1 // pred_check_branch
      %22 = sbr.rel (0) target = $region9
    $region8: #{_net_forward_padded.1} parent=1 // pred_region
      %24 = vsyncadd [#allocation5], 0
      %s26 = sshll.u32 %s1, 4
      %s27 = int_to_ptr.hbm [resolvable:$true] %s26
      %29 = dma.hbm_to_smem %s27, 16, [#allocation6], [#allocation5]
    $region9: #{_net_forward_padded.1} parent=1 // pred_fallthru
      _
    // Predicated region
    $region10: #{_net_forward_padded.1} parent=1 // pred_check
      _
    $region11: #{_net_forward_padded.1} parent=1 // pred_check_branch
      %31 = sbr.rel (0) target = $region13
    $region12: #{_net_forward_padded.1} parent=1 // pred_region
      %33 = dma.done [#allocation3], 64
    $region13: #{_net_forward_padded.1} parent=1 // pred_fallthru
      _
    // Predicated region
    $region14: #{_net_forward_padded.1} parent=1 // pred_check
      _
    $region15: #{_net_forward_padded.1} parent=1 // pred_check_branch
      %35 = sbr.rel (0) target = $region17
    $region16: #{_net_forward_padded.1} parent=1 // pred_region
      %37 = dma.done [#allocation5], 16
    $region17: #{_net_forward_padded.1} parent=1 // pred_fallthru
      _
    %38 = sfence
    %v39 = vld [vmem:[#allocation2] sm:$0x1]
    %v40 = vld [vmem:[#allocation2 + $0x1] sm:$0x1]
    %v41 = vld [vmem:[#allocation2 + $0x2] sm:$0x1]
    %s42 = sld [smem:[#allocation6]]
    %v43 = vstv %s42
    %v44 = vmul.f32 %v39, %v43
    %s45 = sld [smem:[#allocation6 + $0x6]]
    %v46 = vstv %s45
    %v47 = vmul.f32 %v40, %v46
    %v48 = vadd.f32 %v44, %v47
    %s49 = sld [smem:[#allocation6 + $0xc]]
    %v50 = vstv %s49
    %v51 = vmul.f32 %v41, %v50
    %v52 = vadd.f32 %v48, %v51
    %s53 = sld [smem:[#allocation6 + $0x12]]
    %v54 = vstv %s53
    %v55 = vadd.f32 %v52, %v54
    %v56 = vmax.f32 %v55, 0.0
    %s57 = sld [smem:[#allocation6 + $0x1]]
    %v58 = vstv %s57
    %v59 = vmul.f32 %v39, %v58
    %s60 = sld [smem:[#allocation6 + $0x7]]
    %v61 = vstv %s60
    %v62 = vmul.f32 %v40, %v61
    %v63 = vadd.f32 %v59, %v62
    %s64 = sld [smem:[#allocation6 + $0xd]]
    %v65 = vstv %s64
    %v66 = vmul.f32 %v41, %v65
    %v67 = vadd.f32 %v63, %v66
    %s68 = sld [smem:[#allocation6 + $0x13]]
    %v69 = vstv %s68
    %v70 = vadd.f32 %v67, %v69
    %v71 = vmax.f32 %v70, 0.0
    %s72 = sld [smem:[#allocation6 + $0x2]]
    %v73 = vstv %s72
    %v74 = vmul.f32 %v39, %v73
    %s75 = sld [smem:[#allocation6 + $0x8]]
    %v76 = vstv %s75
    %v77 = vmul.f32 %v40, %v76
    %v78 = vadd.f32 %v74, %v77
    %s79 = sld [smem:[#allocation6 + $0xe]]
    %v80 = vstv %s79
    %v81 = vmul.f32 %v41, %v80
    %v82 = vadd.f32 %v78, %v81
    %s83 = sld [smem:[#allocation6 + $0x14]]
    %v84 = vstv %s83
    %v85 = vadd.f32 %v82, %v84
    %v86 = vmax.f32 %v85, 0.0
    %s87 = sld [smem:[#allocation6 + $0x3]]
    %v88 = vstv %s87
    %v89 = vmul.f32 %v39, %v88
    %s90 = sld [smem:[#allocation6 + $0x9]]
    %v91 = vstv %s90
    %v92 = vmul.f32 %v40, %v91
    %v93 = vadd.f32 %v89, %v92
    %s94 = sld [smem:[#allocation6 + $0xf]]
    %v95 = vstv %s94
    %v96 = vmul.f32 %v41, %v95
    %v97 = vadd.f32 %v93, %v96
    %s98 = sld [smem:[#allocation6 + $0x15]]
    %v99 = vstv %s98
    %v100 = vadd.f32 %v97, %v99
    %v101 = vmax.f32 %v100, 0.0
    %s102 = sld [smem:[#allocation6 + $0x4]]
    %v103 = vstv %s102
    %v104 = vmul.f32 %v39, %v103
    %s105 = sld [smem:[#allocation6 + $0xa]]
    %v106 = vstv %s105
    %v107 = vmul.f32 %v40, %v106
    %v108 = vadd.f32 %v104, %v107
    %s109 = sld [smem:[#allocation6 + $0x10]]
    %v110 = vstv %s109
    %v111 = vmul.f32 %v41, %v110
    %v112 = vadd.f32 %v108, %v111
    %s113 = sld [smem:[#allocation6 + $0x16]]
    %v114 = vstv %s113
    %v115 = vadd.f32 %v112, %v114
    %v116 = vmax.f32 %v115, 0.0
    %s117 = sld [smem:[#allocation6 + $0x5]]
    %v118 = vstv %s117
    %v119 = vmul.f32 %v39, %v118
    %s120 = sld [smem:[#allocation6 + $0xb]]
    %v121 = vstv %s120
    %v122 = vmul.f32 %v40, %v121
    %v123 = vadd.f32 %v119, %v122
    %s124 = sld [smem:[#allocation6 + $0x11]]
    %v125 = vstv %s124
    %v126 = vmul.f32 %v41, %v125
    %v127 = vadd.f32 %v123, %v126
    %s128 = sld [smem:[#allocation6 + $0x17]]
    %v129 = vstv %s128
    %v130 = vadd.f32 %v127, %v129
    %v131 = vmax.f32 %v130, 0.0
    %s132 = sld [smem:[#allocation6 + $0x18]]
    %v133 = vstv %s132
    %v134 = vmul.f32 %v56, %v133
    %s135 = sld [smem:[#allocation6 + $0x1e]]
    %v136 = vstv %s135
    %v137 = vmul.f32 %v71, %v136
    %v138 = vadd.f32 %v134, %v137
    %s139 = sld [smem:[#allocation6 + $0x24]]
    %v140 = vstv %s139
    %v141 = vmul.f32 %v86, %v140
    %v142 = vadd.f32 %v138, %v141
    %s143 = sld [smem:[#allocation6 + $0x2a]]
    %v144 = vstv %s143
    %v145 = vmul.f32 %v101, %v144
    %v146 = vadd.f32 %v142, %v145
    %s147 = sld [smem:[#allocation6 + $0x30]]
    %v148 = vstv %s147
    %v149 = vmul.f32 %v116, %v148
    %v150 = vadd.f32 %v146, %v149
    %s151 = sld [smem:[#allocation6 + $0x36]]
    %v152 = vstv %s151
    %v153 = vmul.f32 %v131, %v152
    %v154 = vadd.f32 %v150, %v153
    %s155 = sld [smem:[#allocation6 + $0x3c]]
    %v156 = vstv %s155
    %v157 = vadd.f32 %v154, %v156
    %v158 = vmax.f32 %v157, 0.0
    %s159 = sld [smem:[#allocation6 + $0x19]]
    %v160 = vstv %s159
    %v161 = vmul.f32 %v56, %v160
    %s162 = sld [smem:[#allocation6 + $0x1f]]
    %v163 = vstv %s162
    %v164 = vmul.f32 %v71, %v163
    %v165 = vadd.f32 %v161, %v164
    %s166 = sld [smem:[#allocation6 + $0x25]]
    %v167 = vstv %s166
    %v168 = vmul.f32 %v86, %v167
    %v169 = vadd.f32 %v165, %v168
    %s170 = sld [smem:[#allocation6 + $0x2b]]
    %v171 = vstv %s170
    %v172 = vmul.f32 %v101, %v171
    %v173 = vadd.f32 %v169, %v172
    %s174 = sld [smem:[#allocation6 + $0x31]]
    %v175 = vstv %s174
    %v176 = vmul.f32 %v116, %v175
    %v177 = vadd.f32 %v173, %v176
    %s178 = sld [smem:[#allocation6 + $0x37]]
    %v179 = vstv %s178
    %v180 = vmul.f32 %v131, %v179
    %v181 = vadd.f32 %v177, %v180
    %s182 = sld [smem:[#allocation6 + $0x3d]]
    %v183 = vstv %s182
    %v184 = vadd.f32 %v181, %v183
    %v185 = vmax.f32 %v184, 0.0
    %s186 = sld [smem:[#allocation6 + $0x1a]]
    %v187 = vstv %s186
    %v188 = vmul.f32 %v56, %v187
    %s189 = sld [smem:[#allocation6 + $0x20]]
    %v190 = vstv %s189
    %v191 = vmul.f32 %v71, %v190
    %v192 = vadd.f32 %v188, %v191
    %s193 = sld [smem:[#allocation6 + $0x26]]
    %v194 = vstv %s193
    %v195 = vmul.f32 %v86, %v194
    %v196 = vadd.f32 %v192, %v195
    %s197 = sld [smem:[#allocation6 + $0x2c]]
    %v198 = vstv %s197
    %v199 = vmul.f32 %v101, %v198
    %v200 = vadd.f32 %v196, %v199
    %s201 = sld [smem:[#allocation6 + $0x32]]
    %v202 = vstv %s201
    %v203 = vmul.f32 %v116, %v202
    %v204 = vadd.f32 %v200, %v203
    %s205 = sld [smem:[#allocation6 + $0x38]]
    %v206 = vstv %s205
    %v207 = vmul.f32 %v131, %v206
    %v208 = vadd.f32 %v204, %v207
    %s209 = sld [smem:[#allocation6 + $0x3e]]
    %v210 = vstv %s209
    %v211 = vadd.f32 %v208, %v210
    %v212 = vmax.f32 %v211, 0.0
    %s213 = sld [smem:[#allocation6 + $0x1b]]
    %v214 = vstv %s213
    %v215 = vmul.f32 %v56, %v214
    %s216 = sld [smem:[#allocation6 + $0x21]]
    %v217 = vstv %s216
    %v218 = vmul.f32 %v71, %v217
    %v219 = vadd.f32 %v215, %v218
    %s220 = sld [smem:[#allocation6 + $0x27]]
    %v221 = vstv %s220
    %v222 = vmul.f32 %v86, %v221
    %v223 = vadd.f32 %v219, %v222
    %s224 = sld [smem:[#allocation6 + $0x2d]]
    %v225 = vstv %s224
    %v226 = vmul.f32 %v101, %v225
    %v227 = vadd.f32 %v223, %v226
    %s228 = sld [smem:[#allocation6 + $0x33]]
    %v229 = vstv %s228
    %v230 = vmul.f32 %v116, %v229
    %v231 = vadd.f32 %v227, %v230
    %s232 = sld [smem:[#allocation6 + $0x39]]
    %v233 = vstv %s232
    %v234 = vmul.f32 %v131, %v233
    %v235 = vadd.f32 %v231, %v234
    %s236 = sld [smem:[#allocation6 + $0x3f]]
    %v237 = vstv %s236
    %v238 = vadd.f32 %v235, %v237
    %v239 = vmax.f32 %v238, 0.0
    %s240 = sld [smem:[#allocation6 + $0x1c]]
    %v241 = vstv %s240
    %v242 = vmul.f32 %v56, %v241
    %s243 = sld [smem:[#allocation6 + $0x22]]
    %v244 = vstv %s243
    %v245 = vmul.f32 %v71, %v244
    %v246 = vadd.f32 %v242, %v245
    %s247 = sld [smem:[#allocation6 + $0x28]]
    %v248 = vstv %s247
    %v249 = vmul.f32 %v86, %v248
    %v250 = vadd.f32 %v246, %v249
    %s251 = sld [smem:[#allocation6 + $0x2e]]
    %v252 = vstv %s251
    %v253 = vmul.f32 %v101, %v252
    %v254 = vadd.f32 %v250, %v253
    %s255 = sld [smem:[#allocation6 + $0x34]]
    %v256 = vstv %s255
    %v257 = vmul.f32 %v116, %v256
    %v258 = vadd.f32 %v254, %v257
    %s259 = sld [smem:[#allocation6 + $0x3a]]
    %v260 = vstv %s259
    %v261 = vmul.f32 %v131, %v260
    %v262 = vadd.f32 %v258, %v261
    %s263 = sld [smem:[#allocation6 + $0x40]]
    %v264 = vstv %s263
    %v265 = vadd.f32 %v262, %v264
    %v266 = vmax.f32 %v265, 0.0
    %s267 = sld [smem:[#allocation6 + $0x1d]]
    %v268 = vstv %s267
    %v269 = vmul.f32 %v56, %v268
    %s270 = sld [smem:[#allocation6 + $0x23]]
    %v271 = vstv %s270
    %v272 = vmul.f32 %v71, %v271
    %v273 = vadd.f32 %v269, %v272
    %s274 = sld [smem:[#allocation6 + $0x29]]
    %v275 = vstv %s274
    %v276 = vmul.f32 %v86, %v275
    %v277 = vadd.f32 %v273, %v276
    %s278 = sld [smem:[#allocation6 + $0x2f]]
    %v279 = vstv %s278
    %v280 = vmul.f32 %v101, %v279
    %v281 = vadd.f32 %v277, %v280
    %s282 = sld [smem:[#allocation6 + $0x35]]
    %v283 = vstv %s282
    %v284 = vmul.f32 %v116, %v283
    %v285 = vadd.f32 %v281, %v284
    %s286 = sld [smem:[#allocation6 + $0x3b]]
    %v287 = vstv %s286
    %v288 = vmul.f32 %v131, %v287
    %v289 = vadd.f32 %v285, %v288
    %s290 = sld [smem:[#allocation6 + $0x41]]
    %v291 = vstv %s290
    %v292 = vadd.f32 %v289, %v291
    %v293 = vmax.f32 %v292, 0.0
    %s294 = sld [smem:[#allocation6 + $0x42]]
    %v295 = vstv %s294
    %v296 = vmul.f32 %v158, %v295
    %s297 = sld [smem:[#allocation6 + $0x44]]
    %v298 = vstv %s297
    %v299 = vmul.f32 %v185, %v298
    %v300 = vadd.f32 %v296, %v299
    %s301 = sld [smem:[#allocation6 + $0x46]]
    %v302 = vstv %s301
    %v303 = vmul.f32 %v212, %v302
    %v304 = vadd.f32 %v300, %v303
    %s305 = sld [smem:[#allocation6 + $0x48]]
    %v306 = vstv %s305
    %v307 = vmul.f32 %v239, %v306
    %v308 = vadd.f32 %v304, %v307
    %s309 = sld [smem:[#allocation6 + $0x4a]]
    %v310 = vstv %s309
    %v311 = vmul.f32 %v266, %v310
    %v312 = vadd.f32 %v308, %v311
    %s313 = sld [smem:[#allocation6 + $0x4c]]
    %v314 = vstv %s313
    %v315 = vmul.f32 %v293, %v314
    %v316 = vadd.f32 %v312, %v315
    %s317 = sld [smem:[#allocation6 + $0x4e]]
    %v318 = vstv %s317
    %v319 = vadd.f32 %v316, %v318
    %s320 = sld [smem:[#allocation6 + $0x43]]
    %v321 = vstv %s320
    %v322 = vmul.f32 %v158, %v321
    %s323 = sld [smem:[#allocation6 + $0x45]]
    %v324 = vstv %s323
    %v325 = vmul.f32 %v185, %v324
    %v326 = vadd.f32 %v322, %v325
    %s327 = sld [smem:[#allocation6 + $0x47]]
    %v328 = vstv %s327
    %v329 = vmul.f32 %v212, %v328
    %v330 = vadd.f32 %v326, %v329
    %s331 = sld [smem:[#allocation6 + $0x49]]
    %v332 = vstv %s331
    %v333 = vmul.f32 %v239, %v332
    %v334 = vadd.f32 %v330, %v333
    %s335 = sld [smem:[#allocation6 + $0x4b]]
    %v336 = vstv %s335
    %v337 = vmul.f32 %v266, %v336
    %v338 = vadd.f32 %v334, %v337
    %s339 = sld [smem:[#allocation6 + $0x4d]]
    %v340 = vstv %s339
    %v341 = vmul.f32 %v293, %v340
    %v342 = vadd.f32 %v338, %v341
    %s343 = sld [smem:[#allocation6 + $0x4f]]
    %v344 = vstv %s343
    %v345 = vadd.f32 %v342, %v344
    %v347 = vrot.slane %v345, 7
    %vm349 = vcmask 1040384
    %v350 = vsel %vm349, %v319, %v347
    %351 = vst [vmem:[#allocation7] sm:$0x3] %v350
    // Predicated region
    $region18: #{_net_forward_padded.1} parent=1 // pred_check
      _
    $region19: #{_net_forward_padded.1} parent=1 // pred_check_branch
      %353 = sbr.rel (0) target = $region21
    $region20: #{_net_forward_padded.1} parent=1 // pred_region
      %355 = vsyncadd [#allocation4], 0
      %s357 = sshll.u32 [#allocation7], 4
      %s358 = int_to_ptr.vmem [resolvable:$true] %s357
      %s359 = sshll.u32 %s2, 4
      %s360 = int_to_ptr.hbm [resolvable:$true] %s359
      %362 = dma.vmem_to_hbm [thread:$0]  %s358, 32, %s360, [#allocation4]
    $region21: #{_net_forward_padded.1} parent=1 // pred_fallthru
      _
    // Predicated region
    $region22: #{_net_forward_padded.1} parent=1 // pred_check
      _
    $region23: #{_net_forward_padded.1} parent=1 // pred_check_branch
      %364 = sbr.rel (0) target = $region25
    $region24: #{_net_forward_padded.1} parent=1 // pred_region
      %366 = dma.done [#allocation4], 32
    $region25: #{_net_forward_padded.1} parent=1 // pred_fallthru
      _
    %367 = vsyncpa [#allocation3], 1
    %368 = vsyncpa [#allocation4], 1
    %369 = vsyncpa [#allocation5], 1

</llo_original>
